<compile_context>
chip_gen: v7x
topology: tpu7x:2x2x1
jax: 0.10.0
libtpu: 0.0.40
codegen_flags: <defaults>
</compile_context>

<pallas_src>
import functools

import jax
import jax.numpy as jnp
from jax.experimental import pallas as pl
from jax.experimental.pallas import tpu as pltpu


# -----------------------------------------------------------------------------
# Kernels
# -----------------------------------------------------------------------------
def _finalize(len_ref, w_ref, b_ref, out_ref, sum_acc):
    """Project the pooled (unnormalized) sum, divide by the valid-token count,
    add bias and L2-normalize.  Linearity: (sum/denom)@W + b == (sum@W)/denom + b."""
    proj = jnp.dot(sum_acc[...], w_ref[...].astype(jnp.float32),
                   preferred_element_type=jnp.float32)            # (TB, D) on MXU
    denom = jnp.maximum(len_ref[...].astype(jnp.float32), 1e-9)   # (TB, 1)
    emb = proj / denom + b_ref[...].astype(jnp.float32)           # (TB, D)
    # F.normalize(p=2, dim=1, eps=1e-12): x * rsqrt(max(||x||^2, 1e-24))
    sq = jnp.sum(emb * emb, axis=1, keepdims=True)                # (TB, 1)
    out_ref[...] = (emb * jax.lax.rsqrt(jnp.maximum(sq, 1e-24))).astype(out_ref.dtype)


def _prefix_mask_kernel(len_ref, tok_ref, w_ref, b_ref, out_ref, sum_acc, *,
                        upcast):
    """Grid = (batch_tile, seq_tile); sequence (axis 1) is the reduction axis.

    The standard right-padded (prefix) attention mask is rebuilt in-kernel from
    per-row valid lengths with an iota against the tile's sequence offset, so
    no (B, S, 1) mask is streamed from HBM and no lane-padded mask tile is kept
    in VMEM."""
    s = pl.program_id(1)

    @pl.when(s == 0)
    def _init():
        sum_acc[...] = jnp.zeros_like(sum_acc)

    tok = tok_ref[...]                              # (TB, TS, H)
    if upcast:                                      # mandatory on v5e (no bf16 VPU)
        tok = tok.astype(jnp.float32)
    tb, ts = tok.shape[0], tok.shape[1]
    pos = jax.lax.broadcasted_iota(jnp.int32, (tb, ts, 1), 1) + s * ts
    mask = (pos < len_ref[...][:, None, :]).astype(tok.dtype)     # (TB, TS, 1)
    # Multiply in the streamed dtype (exact for a 0/1 mask); accumulate in f32.
    sum_acc[...] += jnp.sum(tok * mask, axis=1, dtype=jnp.float32)

    @pl.when(s == pl.num_programs(1) - 1)
    def _fin():
        _finalize(len_ref, w_ref, b_ref, out_ref, sum_acc)


def _explicit_mask_kernel(len_ref, tok_ref, mask_ref, w_ref, b_ref, out_ref,
                          sum_acc):
    """General fallback for arbitrary (non-prefix) attention masks; streams the
    pre-expanded (B, S, 1) float mask.  Exact original-module semantics."""
    s = pl.program_id(1)

    @pl.when(s == 0)
    def _init():
        sum_acc[...] = jnp.zeros_like(sum_acc)

    tok = tok_ref[...].astype(jnp.float32)          # (TB, TS, H)
    mask = mask_ref[...].astype(jnp.float32)        # (TB, TS, 1) lane-broadcast only
    sum_acc[...] += jnp.sum(tok * mask, axis=1)

    @pl.when(s == pl.num_programs(1) - 1)
    def _fin():
        _finalize(len_ref, w_ref, b_ref, out_ref, sum_acc)


# -----------------------------------------------------------------------------
# Tiling / per-generation configuration
# -----------------------------------------------------------------------------
def _round_up(x, m):
    return (x + m - 1) // m * m


def _chip_config():
    """Per-generation tile / VMEM budget.  This kernel is pure HBM streaming,
    so tiles are sized as large as each generation's VMEM comfortably allows
    (the pipeline double-buffers the token tile)."""
    kind = ""
    try:
        kind = jax.devices()[0].device_kind.lower()
    except Exception:
        pass
    mib = 1024 * 1024
    if "v6" in kind:       # 128 MiB VMEM, bf16 VPU -> no explicit f32 upcast
        return dict(vmem_limit=80 * mib, tile_bytes=24 * mib,
                    two_batch_tiles=False, upcast=False)
    if "v5" in kind:       # 128 MiB VMEM, no bf16 VPU -> keep the f32 upcast
        return dict(vmem_limit=80 * mib, tile_bytes=24 * mib,
                    two_batch_tiles=False, upcast=True)
    if "7" in kind:        # v7x: 64 MiB VMEM, 2 TensorCores -> >=2 batch tiles
        return dict(vmem_limit=40 * mib, tile_bytes=12 * mib,
                    two_batch_tiles=True, upcast=False)
    # Unknown / older generation: conservative defaults.
    return dict(vmem_limit=None, tile_bytes=4 * mib,
                two_batch_tiles=False, upcast=True)


def _choose_tiles(B, S, H, itemsize, cfg):
    """Pick (TB, TS, B_pad, S_pad) such that (a) BlockSpec (8,128)/full-dim
    constraints hold, (b) tiles divide the (possibly padded) array so the
    dominant (B, S, H) tensor is never copied by jnp.pad unless unavoidable,
    and (c) one token tile stays inside the per-generation byte budget."""
    max_rows = max(64, cfg["tile_bytes"] // (H * itemsize))       # TB*TS cap

    # Batch tile: up to 128 rows (amortize per-step overhead, fill the MXU in
    # the finalize matmul); a multiple of 8 unless the whole batch fits in one
    # tile; on v7x force >=2 tiles so "parallel" shards across both cores.
    tb_cap = min(128, max(8, ((max_rows // 8) // 8) * 8))
    if cfg["two_batch_tiles"] and B >= 16:
        tb_cap = min(tb_cap, max(8, ((B // 2) // 8) * 8))
    if B % 8 != 0 and B <= tb_cap:
        TB, B_pad = B, B
    else:
        b8 = _round_up(B, 8)
        TB = min(tb_cap, b8)
        while b8 % TB:
            TB -= 8
        B_pad = _round_up(B, TB)

    # Sequence tile: multiple of 8 dividing S (S is normally a fixed
    # max_seq_len, already a multiple of 128), or the full sequence.
    ts_cap = max(8, ((max_rows // TB) // 8) * 8)
    if S % 8 != 0 and S <= ts_cap:
        TS, S_pad = S, S
    else:
        s8 = _round_up(S, 8)
        TS = min(ts_cap, s8)
        while s8 % TS:
            TS -= 8
        S_pad = _round_up(S, TS)

    return TB, TS, B_pad, S_pad


# -----------------------------------------------------------------------------
# Wrapper
# -----------------------------------------------------------------------------
def sentence_embedding(token_embeddings, attention_mask, down_w, down_b, *,
                       prefix_mask=True):
    """Masked mean-pool over the sequence, Linear(768->128), L2-normalize.

    token_embeddings: (B, S, H) f32 or bf16 (HF backbone last_hidden_state)
    attention_mask:   (B, S) int/bool/float
    down_w:           (H, D)   (torch down_layer.weight.T)
    down_b:           (D,) or (1, D)

    prefix_mask=True assumes the standard right-padded (prefix) attention mask
    and rebuilds it in-kernel from per-row lengths (no mask HBM stream).
    Pass prefix_mask=False for arbitrary masks (exact original semantics).
    """
    B, S, H = token_embeddings.shape
    D = down_w.shape[1]
    down_b = jnp.reshape(down_b, (1, D))

    cfg = _chip_config()
    itemsize = jnp.dtype(token_embeddings.dtype).itemsize
    TB, TS, B_pad, S_pad = _choose_tiles(B, S, H, itemsize, cfg)

    tok = token_embeddings
    if (B_pad, S_pad) != (B, S):
        # TODO(synk): rare fallback that copies the dominant tensor; only hit
        # when B/S cannot be tiled without padding (large non-multiple-of-8).
        tok = jnp.pad(tok, ((0, B_pad - B), (0, S_pad - S), (0, 0)))

    # Per-row valid-token counts (exact denominator for any 0/1 mask).
    lengths = jnp.sum(attention_mask.astype(jnp.int32), axis=1,
                      dtype=jnp.int32).reshape(B, 1)
    if B_pad != B:
        lengths = jnp.pad(lengths, ((0, B_pad - B), (0, 0)))

    grid = (B_pad // TB, S_pad // TS)

    len_spec = pl.BlockSpec((TB, 1), lambda b, s: (b, 0))
    tok_spec = pl.BlockSpec((TB, TS, H), lambda b, s: (b, s, 0))
    w_spec = pl.BlockSpec((H, D), lambda b, s: (0, 0))          # resident
    b_spec = pl.BlockSpec((1, D), lambda b, s: (0, 0))          # resident
    out_spec = pl.BlockSpec((TB, D), lambda b, s: (b, 0))

    if prefix_mask:
        kernel = functools.partial(_prefix_mask_kernel, upcast=cfg["upcast"])
        in_specs = [len_spec, tok_spec, w_spec, b_spec]
        args = (lengths, tok, down_w, down_b)
        mask_bytes = 0
    else:
        kernel = _explicit_mask_kernel
        mask3 = attention_mask.astype(jnp.float32)[:, :, None]
        if (B_pad, S_pad) != (B, S):
            mask3 = jnp.pad(mask3, ((0, B_pad - B), (0, S_pad - S), (0, 0)))
        in_specs = [len_spec, tok_spec,
                    pl.BlockSpec((TB, TS, 1), lambda b, s: (b, s, 0)),
                    w_spec, b_spec]
        args = (lengths, tok, mask3, down_w, down_b)
        mask_bytes = B_pad * S_pad * 4

    cost = pl.CostEstimate(
        flops=int(2 * B_pad * S_pad * H + 2 * B_pad * H * D + 4 * B_pad * D),
        transcendentals=int(B_pad),
        bytes_accessed=int(B_pad * S_pad * H * itemsize + mask_bytes
                           + B_pad * 4 + H * D * 4 + D * 4 + B_pad * D * 4),
    )

    out = pl.pallas_call(
        kernel,
        out_shape=jax.ShapeDtypeStruct((B_pad, D), jnp.float32),
        grid_spec=pltpu.PrefetchScalarGridSpec(
            num_scalar_prefetch=0,
            grid=grid,
            in_specs=in_specs,
            out_specs=out_spec,
            scratch_shapes=[pltpu.VMEM((TB, H), jnp.float32)],   # masked-sum acc
        ),
        compiler_params=pltpu.CompilerParams(
            dimension_semantics=("parallel", "arbitrary"),
            vmem_limit_bytes=cfg["vmem_limit"],
        ),
        cost_estimate=cost,
    )(*args)

    return out[:B]


# -----------------------------------------------------------------------------
# Reference & test
# -----------------------------------------------------------------------------
def _reference(token_embeddings, attention_mask, down_w, down_b):
    mask = attention_mask.astype(jnp.float32)[:, :, None]
    pooled = jnp.sum(token_embeddings.astype(jnp.float32) * mask, axis=1)
    pooled = pooled / jnp.maximum(jnp.sum(mask, axis=1), 1e-9)
    emb = pooled @ down_w + jnp.reshape(down_b, (1, -1))
    norm = jnp.sqrt(jnp.sum(emb * emb, axis=1, keepdims=True))
    return emb / jnp.maximum(norm, 1e-12)


if __name__ == "__main__":
    B, S, H, D = 2, 8, 768, 128   # 768 -> 128 is fixed by the module's down_layer

    key = jax.random.PRNGKey(0)
    k_tok, k_w, k_b = jax.random.split(key, 3)

    token_embeddings = jax.random.normal(k_tok, (B, S, H), dtype=jnp.float32)
    # standard right-padded (prefix) attention mask
    attention_mask = jnp.array(
        [[1, 1, 1, 1, 1, 1, 0, 0],
         [1, 1, 1, 1, 0, 0, 0, 0]], dtype=jnp.int32)

    # Deterministic Linear(768, 128) params (stored as (H, D) = torch weight.T)
    down_w = jax.random.normal(k_w, (H, D), dtype=jnp.float32) * 0.02
    down_b = jax.random.normal(k_b, (1, D), dtype=jnp.float32) * 0.02

    # 1) prefix-mask fast path (default)
    out = jax.block_until_ready(
        sentence_embedding(token_embeddings, attention_mask, down_w, down_b))
    ref = _reference(token_embeddings, attention_mask, down_w, down_b)
    assert out.shape == (B, D)
    assert jnp.allclose(out, ref, atol=1e-5, rtol=1e-5), "prefix path mismatch"

    # 2) explicit-mask fallback on a non-prefix mask (exact module semantics)
    holey_mask = jnp.array(
        [[1, 0, 1, 1, 0, 1, 1, 0],
         [0, 1, 1, 0, 1, 0, 0, 1]], dtype=jnp.int32)
    out_g = jax.block_until_ready(
        sentence_embedding(token_embeddings, holey_mask, down_w, down_b,
                           prefix_mask=False))
    ref_g = _reference(token_embeddings, holey_mask, down_w, down_b)
    assert jnp.allclose(out_g, ref_g, atol=1e-5, rtol=1e-5), "general path mismatch"

    # 3) bf16 token transport (halves HBM traffic on this mem-bound kernel)
    tok_bf16 = token_embeddings.astype(jnp.bfloat16)
    out_bf = jax.block_until_ready(
        sentence_embedding(tok_bf16, attention_mask, down_w, down_b))
    ref_bf = _reference(tok_bf16.astype(jnp.float32), attention_mask, down_w, down_b)
    assert jnp.allclose(out_bf, ref_bf, atol=1e-3, rtol=1e-3), "bf16 path mismatch"

    print("KERNEL_OK")
</pallas_src>

<mosaic_0001>
module attributes {stable_mosaic.version = 11 : i64} {
  func.func @_prefix_mask_kernel(%arg0: i32, %arg1: i32, %arg2: memref<2x1xi32, #tpu.memory_space<vmem>>, %arg3: memref<2x8x768xf32, #tpu.memory_space<vmem>>, %arg4: memref<768x128xf32, #tpu.memory_space<vmem>>, %arg5: memref<1x128xf32, #tpu.memory_space<vmem>>, %arg6: memref<2x128xf32, #tpu.memory_space<vmem>>, %arg7: memref<2x768xf32, #tpu.memory_space<vmem>>) attributes {dimension_semantics = [#tpu.dimension_semantics<parallel>, #tpu.dimension_semantics<arbitrary>], iteration_bounds = array<i64: 1, 1>, scalar_prefetch = 0 : i64, scratch_operands = 1 : i64, tpu.core_type = #tpu.core_type<tc>, window_params = [{transform_indices = @transform_0, window_bounds = array<i64: 2, 1>}, {transform_indices = @transform_1, window_bounds = array<i64: 2, 8, 768>}, {pipeline_mode = #tpu.pipeline_mode<synchronous>, transform_indices = @transform_2, window_bounds = array<i64: 768, 128>}, {pipeline_mode = #tpu.pipeline_mode<synchronous>, transform_indices = @transform_3, window_bounds = array<i64: 1, 128>}, {transform_indices = @transform_4, window_bounds = array<i64: 2, 128>}]} {
    %c0_i32 = arith.constant 0 : i32
    %0 = arith.cmpi eq, %arg1, %c0_i32 : i32
    %1 = arith.extui %0 : i1 to i32
    %c0_i32_0 = arith.constant 0 : i32
    %2 = arith.cmpi ne, %1, %c0_i32_0 : i32
    scf.if %2 {
      %cst_11 = arith.constant 0.000000e+00 : f32
      %23 = vector.broadcast %cst_11 : f32 to vector<2x768xf32>
      %c0_12 = arith.constant 0 : index
      %c0_13 = arith.constant 0 : index
      %24 = vector.load %arg7[%c0_12, %c0_13] : memref<2x768xf32, #tpu.memory_space<vmem>>, vector<2x768xf32>
      tpu.vector_store %arg7[%c0_12, %c0_13], %23 {strides = array<i32>} : memref<2x768xf32, #tpu.memory_space<vmem>>, vector<2x768xf32>,
    } else {
    }
    %c0 = arith.constant 0 : index
    %c0_1 = arith.constant 0 : index
    %c0_2 = arith.constant 0 : index
    %3 = vector.load %arg3[%c0, %c0_1, %c0_2] : memref<2x8x768xf32, #tpu.memory_space<vmem>>, vector<2x8x768xf32>
    %4 = tpu.iota {dimensions = array<i32: 1>} : vector<2x8x1xi32>
    %c8_i32 = arith.constant 8 : i32
    %5 = arith.muli %arg1, %c8_i32 : i32
    %6 = vector.broadcast %5 : i32 to vector<2x8x1xi32>
    %7 = arith.addi %4, %6 : vector<2x8x1xi32>
    %c0_3 = arith.constant 0 : index
    %c0_4 = arith.constant 0 : index
    %8 = vector.load %arg2[%c0_3, %c0_4] : memref<2x1xi32, #tpu.memory_space<vmem>>, vector<2x1xi32>
    %9 = vector.shape_cast %8 : vector<2x1xi32> to vector<2x1x1xi32>
    %10 = vector.broadcast %9 : vector<2x1x1xi32> to vector<2x8x1xi32>
    %11 = arith.cmpi slt, %7, %10 : vector<2x8x1xi32>
    %12 = arith.extui %11 : vector<2x8x1xi1> to vector<2x8x1xi32>
    %13 = arith.sitofp %12 : vector<2x8x1xi32> to vector<2x8x1xf32>
    %c0_5 = arith.constant 0 : index
    %c0_6 = arith.constant 0 : index
    %14 = vector.load %arg7[%c0_5, %c0_6] : memref<2x768xf32, #tpu.memory_space<vmem>>, vector<2x768xf32>
    %15 = vector.broadcast %13 : vector<2x8x1xf32> to vector<2x8x768xf32>
    %16 = arith.mulf %3, %15 : vector<2x8x768xf32>
    %cst = arith.constant dense<0.000000e+00> : vector<2x768xf32>
    %17 = vector.multi_reduction <add>, %16, %cst [1] : vector<2x8x768xf32> to vector<2x768xf32>
    %18 = arith.addf %14, %17 : vector<2x768xf32>
    %c0_7 = arith.constant 0 : index
    %c0_8 = arith.constant 0 : index
    %19 = vector.load %arg7[%c0_7, %c0_8] : memref<2x768xf32, #tpu.memory_space<vmem>>, vector<2x768xf32>
    tpu.vector_store %arg7[%c0_7, %c0_8], %18 {strides = array<i32>} : memref<2x768xf32, #tpu.memory_space<vmem>>, vector<2x768xf32>,
    %c0_i32_9 = arith.constant 0 : i32
    %20 = arith.cmpi eq, %arg1, %c0_i32_9 : i32
    %21 = arith.extui %20 : i1 to i32
    %c0_i32_10 = arith.constant 0 : i32
    %22 = arith.cmpi ne, %21, %c0_i32_10 : i32
    scf.if %22 {
      %c0_11 = arith.constant 0 : index
      %c0_12 = arith.constant 0 : index
      %23 = vector.load %arg7[%c0_11, %c0_12] : memref<2x768xf32, #tpu.memory_space<vmem>>, vector<2x768xf32>
      %c0_13 = arith.constant 0 : index
      %c0_14 = arith.constant 0 : index
      %24 = vector.load %arg4[%c0_13, %c0_14] : memref<768x128xf32, #tpu.memory_space<vmem>>, vector<768x128xf32>
      %cst_15 = arith.constant dense<0.000000e+00> : vector<2x128xf32>
      %25 = tpu.matmul %23, %24, %cst_15 {dimension_numbers = #tpu.dot_dimension_numbers<[1], [0], [0], [1], [0, 0, 1, 1], [], []>} : vector<2x768xf32>, vector<768x128xf32>, vector<2x128xf32> -> vector<2x128xf32>
      %c0_16 = arith.constant 0 : index
      %c0_17 = arith.constant 0 : index
      %26 = vector.load %arg2[%c0_16, %c0_17] : memref<2x1xi32, #tpu.memory_space<vmem>>, vector<2x1xi32>
      %27 = arith.sitofp %26 : vector<2x1xi32> to vector<2x1xf32>
      %cst_18 = arith.constant 9.99999971E-10 : f32
      %28 = vector.broadcast %cst_18 : f32 to vector<2x1xf32>
      %29 = arith.maximumf %27, %28 : vector<2x1xf32>
      %30 = vector.broadcast %29 : vector<2x1xf32> to vector<2x128xf32>
      %31 = arith.divf %25, %30 : vector<2x128xf32>
      %c0_19 = arith.constant 0 : index
      %c0_20 = arith.constant 0 : index
      %32 = vector.load %arg5[%c0_19, %c0_20] : memref<1x128xf32, #tpu.memory_space<vmem>>, vector<1x128xf32>
      %33 = vector.broadcast %32 : vector<1x128xf32> to vector<2x128xf32>
      %34 = arith.addf %31, %33 : vector<2x128xf32>
      %35 = arith.mulf %34, %34 : vector<2x128xf32>
      %cst_21 = arith.constant dense<0.000000e+00> : vector<2xf32>
      %36 = vector.multi_reduction <add>, %35, %cst_21 [1] : vector<2x128xf32> to vector<2xf32>
      %37 = vector.shape_cast %36 : vector<2xf32> to vector<2x1xf32>
      %cst_22 = arith.constant 1.000000e-24 : f32
      %38 = vector.broadcast %cst_22 : f32 to vector<2x1xf32>
      %39 = arith.maximumf %37, %38 : vector<2x1xf32>
      %40 = math.rsqrt %39 : vector<2x1xf32>
      %41 = vector.broadcast %40 : vector<2x1xf32> to vector<2x128xf32>
      %42 = arith.mulf %34, %41 : vector<2x128xf32>
      %c0_23 = arith.constant 0 : index
      %c0_24 = arith.constant 0 : index
      %43 = vector.load %arg6[%c0_23, %c0_24] : memref<2x128xf32, #tpu.memory_space<vmem>>, vector<2x128xf32>
      tpu.vector_store %arg6[%c0_23, %c0_24], %42 {strides = array<i32>} : memref<2x128xf32, #tpu.memory_space<vmem>>, vector<2x128xf32>,
    } else {
    }
    return
  }
  func.func @transform_0(%arg0: i32, %arg1: i32) -> (i32, i32) {
    %c0_i32 = arith.constant 0 : i32
    %c0_i32_0 = arith.constant 0 : i32
    return %arg0, %c0_i32 : i32, i32
  }
  func.func @transform_1(%arg0: i32, %arg1: i32) -> (i32, i32, i32) {
    %c0_i32 = arith.constant 0 : i32
    %c0_i32_0 = arith.constant 0 : i32
    return %arg0, %arg1, %c0_i32 : i32, i32, i32
  }
  func.func @transform_2(%arg0: i32, %arg1: i32) -> (i32, i32) {
    %c0_i32 = arith.constant 0 : i32
    %c0_i32_0 = arith.constant 0 : i32
    %c0_i32_1 = arith.constant 0 : i32
    return %c0_i32, %c0_i32_0 : i32, i32
  }
  func.func @transform_3(%arg0: i32, %arg1: i32) -> (i32, i32) {
    %c0_i32 = arith.constant 0 : i32
    %c0_i32_0 = arith.constant 0 : i32
    %c0_i32_1 = arith.constant 0 : i32
    return %c0_i32, %c0_i32_0 : i32, i32
  }
  func.func @transform_4(%arg0: i32, %arg1: i32) -> (i32, i32) {
    %c0_i32 = arith.constant 0 : i32
    %c0_i32_0 = arith.constant 0 : i32
    return %arg0, %c0_i32 : i32, i32
  }
}

</mosaic_0001>

<llo_original>
// kernel: tpu_custom_call.1
$region0: #{tpu_custom_call.1}
  #allocation0 [shape = 'u32[]', space=smem, size = 0x4, offset = 0x4, fixed_abs, tag = 'smem constant byte address 0x4 - core index']
  #allocation1 [shape = 'u32[144,128]{1,0:T(1,128)}', space=vmem, size = 0x12000, scoped, tag = 'internal scratch']
  #allocation2 [shape = 'f32[2,768]{1,0:T(2,128)}', space=vmem, size = 0x1800, scoped, tag = 'scratch operand']
  %s0 = inlined_call_operand.vmem [shape: s32[2,1], index: 0, kind: input, shape index: {}]
  %s1 = inlined_call_operand.hbm [shape: f32[2,8,768], index: 1, kind: input, shape index: {}]
  %s2 = inlined_call_operand.hbm [shape: f32[768,128], index: 2, kind: input, shape index: {}]
  %s3 = inlined_call_operand.vmem [shape: f32[1,128], index: 3, kind: input, shape index: {}]
  %s4 = inlined_call_operand.hbm [shape: f32[2,128], index: 4, kind: output, shape index: {}]
  %s5 = sld [smem:[#allocation0]]
  $region42: #{tpu_custom_call.1} parent=0
    _
  %s7 = ssub.s32 1, %s5
  %s8 = scalar_select 0, %s7, %s5
  $region1: #{tpu_custom_call.1} parent=0
    #allocation3 [shape = 'u8[49152]{0}', space=vmem, size = 0xc000, scoped, tag = 'input window, operand 1, single buffered']
    #allocation4 [shape = 's32[1]{0}', space=sflag, size = 0x4, scoped, tag = 'scoped memory for tpu_custom_call.1']
    #allocation5 [shape = 's32[1]{0}', space=sflag, size = 0x4, scoped, tag = 'scoped memory for tpu_custom_call.1']
    #allocation6 [shape = 'u8[393216]{0}', space=vmem, size = 0x60000, scoped, tag = 'input window, operand 2, single buffered']
    #allocation7 [shape = 's32[1]{0}', space=sflag, size = 0x4, scoped, tag = 'scoped memory for tpu_custom_call.1']
    #allocation8 [shape = 'u8[1024]{0}', space=vmem, size = 0x400, scoped, tag = 'output window, operand 0, single buffered']
    %9 = vsyncpa [#allocation4], 0
    %10 = vsyncpa [#allocation7], 0
    %11 = vsyncpa [#allocation5], 0
    // Predicated region
    $region2: #{tpu_custom_call.1} parent=1 // pred_check
      _
    $region3: #{tpu_custom_call.1} parent=1 // pred_check_branch
      %13 = sbr.rel (0) target = $region5
    $region4: #{tpu_custom_call.1} parent=1 // pred_region
      _
    $region5: #{tpu_custom_call.1} parent=1 // pred_fallthru
      _
    // Predicated region
    $region6: #{tpu_custom_call.1} parent=1 // pred_check
      _
    $region7: #{tpu_custom_call.1} parent=1 // pred_check_branch
      %15 = sbr.rel (0) target = $region9
    $region8: #{tpu_custom_call.1} parent=1 // pred_region
      %s17 = ssub.s32 1536, 1536
      %18 = vsyncadd [#allocation4], %s17
      %s19 = sshll.u32 [#allocation3], 4
      %s20 = int_to_ptr.vmem [resolvable:$true] %s19
      %25 = dma.hbm_to_vmem [thread:$0]  %s1, 1536, %s20, [#allocation4], 768, 768, 48
    $region9: #{tpu_custom_call.1} parent=1 // pred_fallthru
      _
    // Predicated region
    $region10: #{tpu_custom_call.1} parent=1 // pred_check
      _
    $region11: #{tpu_custom_call.1} parent=1 // pred_check_branch
      %27 = sbr.rel (0) target = $region13
    $region12: #{tpu_custom_call.1} parent=1 // pred_region
      %s29 = ssub.s32 12288, 12288
      %30 = vsyncadd [#allocation7], %s29
      %s31 = sshll.u32 [#allocation6], 4
      %s32 = int_to_ptr.vmem [resolvable:$true] %s31
      %37 = dma.hbm_to_vmem [thread:$0]  %s2, 12288, %s32, [#allocation7], 128, 128, 8
    $region13: #{tpu_custom_call.1} parent=1 // pred_fallthru
      _
    // Predicated region
    $region14: #{tpu_custom_call.1} parent=1 // pred_check
      _
    $region15: #{tpu_custom_call.1} parent=1 // pred_check_branch
      %39 = sbr.rel (0) target = $region17
    $region16: #{tpu_custom_call.1} parent=1 // pred_region
      _
    $region17: #{tpu_custom_call.1} parent=1 // pred_fallthru
      _
    // Predicated region
    $region18: #{tpu_custom_call.1} parent=1 // pred_check
      _
    $region19: #{tpu_custom_call.1} parent=1 // pred_check_branch
      %41 = sbr.rel (0) target = $region21
    $region20: #{tpu_custom_call.1} parent=1 // pred_region
      %42 = dma.done [#allocation4], 1536
    $region21: #{tpu_custom_call.1} parent=1 // pred_fallthru
      _
    // Predicated region
    $region22: #{tpu_custom_call.1} parent=1 // pred_check
      _
    $region23: #{tpu_custom_call.1} parent=1 // pred_check_branch
      %44 = sbr.rel (0) target = $region25
    $region24: #{tpu_custom_call.1} parent=1 // pred_region
      %45 = dma.done [#allocation7], 12288
    $region25: #{tpu_custom_call.1} parent=1 // pred_fallthru
      _
    %p46 = scmp.eq.s32.totalorder 0, 0
    // Predicated region
    $region26: #{tpu_custom_call.1} parent=1 // pred_check
      %p47 = pneg %p46
    $region27: #{tpu_custom_call.1} parent=1 // pred_check_branch
      %49 = sbr.rel (%p47) target = $region29
    $region28: #{tpu_custom_call.1} parent=1 // pred_region
      %50 = vst [vmem:[#allocation2] sm:$0xff] 0.0
      %51 = vst [vmem:[#allocation2 + $0x8] sm:$0xf] 0.0
    $region29: #{tpu_custom_call.1} parent=1 // pred_fallthru
      _
    %v52 = vld [vmem:[#allocation3] sm:$0xff]
    %v53 = vld [vmem:[#allocation3 + $0x8] sm:$0xff]
    %v54 = vld [vmem:[#allocation3 + $0x10] sm:$0xff]
    %v55 = vld [vmem:[#allocation3 + $0x18] sm:$0xff]
    %v56 = vld [vmem:[#allocation3 + $0x20] sm:$0xff]
    %v57 = vld [vmem:[#allocation3 + $0x28] sm:$0xff]
    %v58 = vld [vmem:[#allocation3 + $0x30] sm:$0xff]
    %v59 = vld [vmem:[#allocation3 + $0x38] sm:$0xff]
    %v60 = vld [vmem:[#allocation3 + $0x40] sm:$0xff]
    %v61 = vld [vmem:[#allocation3 + $0x48] sm:$0xff]
    %v62 = vld [vmem:[#allocation3 + $0x50] sm:$0xff]
    %v63 = vld [vmem:[#allocation3 + $0x58] sm:$0xff]
    %v64 = vlaneseq
    %v65 = vshrl.u32 %v64, 7
    %s66 = smul.u32 0, 8
    %v67 = vstv %s66
    %v68 = vadd.s32 %v65, %v67
    %v69 = vld [vmem:[%s0] sm:$0x3]
    %v71 = vunpack.c.l.s4 1966171168
    %v72 = vunpack.c.0.s8 %v71
    %v73 = vlaneseq
    %v74 = vshrl.u32 %v73, 7
    %v75 = vsub.s32 %v72, %v74
    %v76 = vrot.slane %v69, %v75
    %v77 = vcombine.high %v76, %v76
    %v79 = vunpack.c.l.s4 1966171168
    %v80 = vunpack.c.0.s8 %v79
    %v81 = vlaneseq
    %v82 = vshrl.u32 %v81, 7
    %v83 = vsub.s32 %v80, %v82
    %v84 = vrot.slane %v76, %v83
    %v86 = vunpack.c.l.s4 1966171168
    %v87 = vunpack.c.0.s8 %v86
    %v88 = vlaneseq
    %v89 = vshrl.u32 %v88, 7
    %v90 = vsub.s32 %v87, %v89
    %v91 = vrot.slane %v77, %v90
    %v92 = vlaneseq
    %v93 = vshrl.u32 %v92, 7
    %v94 = vsub.s32 0, %v93
    %v95 = vrot.slane %v84, %v94
    %v96 = vlaneseq
    %v97 = vshrl.u32 %v96, 7
    %v98 = vsub.s32 0, %v97
    %v99 = vrot.slane %v91, %v98
    %vm100 = vcmp.lt.s32.totalorder %v68, %v95
    %vm101 = vcmp.lt.s32.totalorder %v68, %v99
    %v102 = vsel %vm100, 1, 0
    %v103 = vsel %vm101, 1, 0
    %v104 = vcvt.s32.f32 %v102
    %v105 = vcvt.s32.f32 %v103
    %v106 = vld [vmem:[#allocation2] sm:$0xff]
    %v107 = vld [vmem:[#allocation2 + $0x8] sm:$0xf]
    %109 = vset.pattern.permute.xlu0 0
    %110 = vperm.xlu0 %109, %v104
    %v111 = vpop.permute.xlu0 %110
    %114 = vset.pattern.permute.xlu0 0
    %115 = vperm.xlu0 %114, %v105
    %v116 = vpop.permute.xlu0 %115
    %v118 = vmul.f32 %v52, %v111
    %v119 = vmul.f32 %v53, %v111
    %v120 = vmul.f32 %v54, %v111
    %v121 = vmul.f32 %v55, %v111
    %v122 = vmul.f32 %v56, %v111
    %v123 = vmul.f32 %v57, %v111
    %v124 = vmul.f32 %v58, %v116
    %v125 = vmul.f32 %v59, %v116
    %v126 = vmul.f32 %v60, %v116
    %v127 = vmul.f32 %v61, %v116
    %v128 = vmul.f32 %v62, %v116
    %v129 = vmul.f32 %v63, %v116
    %v130 = vrot.slane %v118, 4
    %v131 = vadd.f32 %v118, %v130
    %v132 = vrot.slane %v131, 2
    %v133 = vadd.f32 %v131, %v132
    %v134 = vrot.slane %v133, 1
    %v135 = vadd.f32 %v133, %v134
    %v136 = vrot.slane %v119, 4
    %v137 = vadd.f32 %v119, %v136
    %v138 = vrot.slane %v137, 2
    %v139 = vadd.f32 %v137, %v138
    %v140 = vrot.slane %v139, 1
    %v141 = vadd.f32 %v139, %v140
    %v142 = vrot.slane %v120, 4
    %v143 = vadd.f32 %v120, %v142
    %v144 = vrot.slane %v143, 2
    %v145 = vadd.f32 %v143, %v144
    %v146 = vrot.slane %v145, 1
    %v147 = vadd.f32 %v145, %v146
    %v148 = vrot.slane %v121, 4
    %v149 = vadd.f32 %v121, %v148
    %v150 = vrot.slane %v149, 2
    %v151 = vadd.f32 %v149, %v150
    %v152 = vrot.slane %v151, 1
    %v153 = vadd.f32 %v151, %v152
    %v154 = vrot.slane %v122, 4
    %v155 = vadd.f32 %v122, %v154
    %v156 = vrot.slane %v155, 2
    %v157 = vadd.f32 %v155, %v156
    %v158 = vrot.slane %v157, 1
    %v159 = vadd.f32 %v157, %v158
    %v160 = vrot.slane %v123, 4
    %v161 = vadd.f32 %v123, %v160
    %v162 = vrot.slane %v161, 2
    %v163 = vadd.f32 %v161, %v162
    %v164 = vrot.slane %v163, 1
    %v165 = vadd.f32 %v163, %v164
    %v166 = vrot.slane %v124, 4
    %v167 = vadd.f32 %v124, %v166
    %v168 = vrot.slane %v167, 2
    %v169 = vadd.f32 %v167, %v168
    %v170 = vrot.slane %v169, 1
    %v171 = vadd.f32 %v169, %v170
    %v172 = vrot.slane %v125, 4
    %v173 = vadd.f32 %v125, %v172
    %v174 = vrot.slane %v173, 2
    %v175 = vadd.f32 %v173, %v174
    %v176 = vrot.slane %v175, 1
    %v177 = vadd.f32 %v175, %v176
    %v178 = vrot.slane %v126, 4
    %v179 = vadd.f32 %v126, %v178
    %v180 = vrot.slane %v179, 2
    %v181 = vadd.f32 %v179, %v180
    %v182 = vrot.slane %v181, 1
    %v183 = vadd.f32 %v181, %v182
    %v184 = vrot.slane %v127, 4
    %v185 = vadd.f32 %v127, %v184
    %v186 = vrot.slane %v185, 2
    %v187 = vadd.f32 %v185, %v186
    %v188 = vrot.slane %v187, 1
    %v189 = vadd.f32 %v187, %v188
    %v190 = vrot.slane %v128, 4
    %v191 = vadd.f32 %v128, %v190
    %v192 = vrot.slane %v191, 2
    %v193 = vadd.f32 %v191, %v192
    %v194 = vrot.slane %v193, 1
    %v195 = vadd.f32 %v193, %v194
    %v196 = vrot.slane %v129, 4
    %v197 = vadd.f32 %v129, %v196
    %v198 = vrot.slane %v197, 2
    %v199 = vadd.f32 %v197, %v198
    %v200 = vrot.slane %v199, 1
    %v201 = vadd.f32 %v199, %v200
    %v214 = vcombine.low %v135, %v141
    %v215 = vcombine.low %v147, %v153
    %v217 = vunpack.c.l.s4 1983009808
    %v218 = vunpack.c.0.s8 %v217
    %v219 = vlaneseq
    %v220 = vshrl.u32 %v219, 7
    %v221 = vsub.s32 %v218, %v220
    %v222 = vrot.slane %v214, %v221
    %v224 = vunpack.c.l.s4 1983009808
    %v225 = vunpack.c.0.s8 %v224
    %v226 = vlaneseq
    %v227 = vshrl.u32 %v226, 7
    %v228 = vsub.s32 %v225, %v227
    %v229 = vrot.slane %v215, %v228
    %v230 = vcombine.low %v222, %v229
    %v231 = vcombine.low %v159, %v165
    %v233 = vunpack.c.l.s4 1983009808
    %v234 = vunpack.c.0.s8 %v233
    %v235 = vlaneseq
    %v236 = vshrl.u32 %v235, 7
    %v237 = vsub.s32 %v234, %v236
    %v238 = vrot.slane %v231, %v237
    %v239 = vcombine.low %v171, %v177
    %v240 = vcombine.low %v183, %v189
    %v242 = vunpack.c.l.s4 1983009808
    %v243 = vunpack.c.0.s8 %v242
    %v244 = vlaneseq
    %v245 = vshrl.u32 %v244, 7
    %v246 = vsub.s32 %v243, %v245
    %v247 = vrot.slane %v239, %v246
    %v249 = vunpack.c.l.s4 1983009808
    %v250 = vunpack.c.0.s8 %v249
    %v251 = vlaneseq
    %v252 = vshrl.u32 %v251, 7
    %v253 = vsub.s32 %v250, %v252
    %v254 = vrot.slane %v240, %v253
    %v255 = vcombine.low %v247, %v254
    %v256 = vcombine.low %v195, %v201
    %v258 = vunpack.c.l.s4 1983009808
    %v259 = vunpack.c.0.s8 %v258
    %v260 = vlaneseq
    %v261 = vshrl.u32 %v260, 7
    %v262 = vsub.s32 %v259, %v261
    %v263 = vrot.slane %v256, %v262
    %vm264 = vcmask 1044484
    %v265 = vsel %vm264, %v230, %v230
    %vm266 = vcmask 1046534
    %v267 = vsel %vm266, %v230, %v265
    %v268 = vrot.slane %v255, 7
    %vm269 = vcmask 1041409
    %v270 = vsel %vm269, %v268, %v267
    %vm271 = vcmask 1043459
    %v272 = vsel %vm271, %v268, %v270
    %vm273 = vcmask 1045509
    %v274 = vsel %vm273, %v268, %v272
    %vm275 = vcmask 1047559
    %v276 = vsel %vm275, %v268, %v274
    %v277 = vsel %vm264, %v238, %v238
    %v278 = vsel %vm266, %v238, %v277
    %v279 = vrot.slane %v263, 7
    %v280 = vsel %vm269, %v279, %v278
    %v281 = vsel %vm271, %v279, %v280
    %v282 = vsel %vm273, %v279, %v281
    %v283 = vsel %vm275, %v279, %v282
    %v286 = vadd.f32 %v106, %v276
    %v287 = vadd.f32 %v107, %v283
    %288 = vst [vmem:[#allocation2] sm:$0xff] %v286
    %289 = vst [vmem:[#allocation2 + $0x8] sm:$0xf] %v287
    // Predicated region
    $region30: #{tpu_custom_call.1} parent=1 // pred_check
      %p290 = pneg %p46
    $region31: #{tpu_custom_call.1} parent=1 // pred_check_branch
      %292 = sbr.rel (%p290) target = $region33
    $region32: #{tpu_custom_call.1} parent=1 // pred_region
      %v293 = vld [vmem:[#allocation2] sm:$0xff]
      %v294 = vld [vmem:[#allocation2 + $0x8] sm:$0xf]
      %v295 = vld [vmem:[#allocation6] sm:$0xff]
      %v296 = vld [vmem:[#allocation6 + $0x8] sm:$0xff]
      %v297 = vld [vmem:[#allocation6 + $0x10] sm:$0xff]
      %v298 = vld [vmem:[#allocation6 + $0x18] sm:$0xff]
      %v299 = vld [vmem:[#allocation6 + $0x20] sm:$0xff]
      %v300 = vld [vmem:[#allocation6 + $0x28] sm:$0xff]
      %v301 = vld [vmem:[#allocation6 + $0x30] sm:$0xff]
      %v302 = vld [vmem:[#allocation6 + $0x38] sm:$0xff]
      %v303 = vld [vmem:[#allocation6 + $0x40] sm:$0xff]
      %v304 = vld [vmem:[#allocation6 + $0x48] sm:$0xff]
      %v305 = vld [vmem:[#allocation6 + $0x50] sm:$0xff]
      %v306 = vld [vmem:[#allocation6 + $0x58] sm:$0xff]
      %v307 = vld [vmem:[#allocation6 + $0x60] sm:$0xff]
      %v308 = vld [vmem:[#allocation6 + $0x68] sm:$0xff]
      %v309 = vld [vmem:[#allocation6 + $0x70] sm:$0xff]
      %v310 = vld [vmem:[#allocation6 + $0x78] sm:$0xff]
      %v311 = vld [vmem:[#allocation6 + $0x80] sm:$0xff]
      %v312 = vld [vmem:[#allocation6 + $0x88] sm:$0xff]
      %v313 = vld [vmem:[#allocation6 + $0x90] sm:$0xff]
      %v314 = vld [vmem:[#allocation6 + $0x98] sm:$0xff]
      %v315 = vld [vmem:[#allocation6 + $0xa0] sm:$0xff]
      %v316 = vld [vmem:[#allocation6 + $0xa8] sm:$0xff]
      %v317 = vld [vmem:[#allocation6 + $0xb0] sm:$0xff]
      %v318 = vld [vmem:[#allocation6 + $0xb8] sm:$0xff]
      %v319 = vld [vmem:[#allocation6 + $0xc0] sm:$0xff]
      %v320 = vld [vmem:[#allocation6 + $0xc8] sm:$0xff]
      %v321 = vld [vmem:[#allocation6 + $0xd0] sm:$0xff]
      %v322 = vld [vmem:[#allocation6 + $0xd8] sm:$0xff]
      %v323 = vld [vmem:[#allocation6 + $0xe0] sm:$0xff]
      %v324 = vld [vmem:[#allocation6 + $0xe8] sm:$0xff]
      %v325 = vld [vmem:[#allocation6 + $0xf0] sm:$0xff]
      %v326 = vld [vmem:[#allocation6 + $0xf8] sm:$0xff]
      %v327 = vld [vmem:[#allocation6 + $0x100] sm:$0xff]
      %v328 = vld [vmem:[#allocation6 + $0x108] sm:$0xff]
      %v329 = vld [vmem:[#allocation6 + $0x110] sm:$0xff]
      %v330 = vld [vmem:[#allocation6 + $0x118] sm:$0xff]
      %v331 = vld [vmem:[#allocation6 + $0x120] sm:$0xff]
      %v332 = vld [vmem:[#allocation6 + $0x128] sm:$0xff]
      %v333 = vld [vmem:[#allocation6 + $0x130] sm:$0xff]
      %v334 = vld [vmem:[#allocation6 + $0x138] sm:$0xff]
      %v335 = vld [vmem:[#allocation6 + $0x140] sm:$0xff]
      %v336 = vld [vmem:[#allocation6 + $0x148] sm:$0xff]
      %v337 = vld [vmem:[#allocation6 + $0x150] sm:$0xff]
      %v338 = vld [vmem:[#allocation6 + $0x158] sm:$0xff]
      %v339 = vld [vmem:[#allocation6 + $0x160] sm:$0xff]
      %v340 = vld [vmem:[#allocation6 + $0x168] sm:$0xff]
      %v341 = vld [vmem:[#allocation6 + $0x170] sm:$0xff]
      %v342 = vld [vmem:[#allocation6 + $0x178] sm:$0xff]
      %v343 = vld [vmem:[#allocation6 + $0x180] sm:$0xff]
      %v344 = vld [vmem:[#allocation6 + $0x188] sm:$0xff]
      %v345 = vld [vmem:[#allocation6 + $0x190] sm:$0xff]
      %v346 = vld [vmem:[#allocation6 + $0x198] sm:$0xff]
      %v347 = vld [vmem:[#allocation6 + $0x1a0] sm:$0xff]
      %v348 = vld [vmem:[#allocation6 + $0x1a8] sm:$0xff]
      %v349 = vld [vmem:[#allocation6 + $0x1b0] sm:$0xff]
      %v350 = vld [vmem:[#allocation6 + $0x1b8] sm:$0xff]
      %v351 = vld [vmem:[#allocation6 + $0x1c0] sm:$0xff]
      %v352 = vld [vmem:[#allocation6 + $0x1c8] sm:$0xff]
      %v353 = vld [vmem:[#allocation6 + $0x1d0] sm:$0xff]
      %v354 = vld [vmem:[#allocation6 + $0x1d8] sm:$0xff]
      %v355 = vld [vmem:[#allocation6 + $0x1e0] sm:$0xff]
      %v356 = vld [vmem:[#allocation6 + $0x1e8] sm:$0xff]
      %v357 = vld [vmem:[#allocation6 + $0x1f0] sm:$0xff]
      %v358 = vld [vmem:[#allocation6 + $0x1f8] sm:$0xff]
      %v359 = vld [vmem:[#allocation6 + $0x200] sm:$0xff]
      %v360 = vld [vmem:[#allocation6 + $0x208] sm:$0xff]
      %v361 = vld [vmem:[#allocation6 + $0x210] sm:$0xff]
      %v362 = vld [vmem:[#allocation6 + $0x218] sm:$0xff]
      %v363 = vld [vmem:[#allocation6 + $0x220] sm:$0xff]
      %v364 = vld [vmem:[#allocation6 + $0x228] sm:$0xff]
      %v365 = vld [vmem:[#allocation6 + $0x230] sm:$0xff]
      %v366 = vld [vmem:[#allocation6 + $0x238] sm:$0xff]
      %v367 = vld [vmem:[#allocation6 + $0x240] sm:$0xff]
      %v368 = vld [vmem:[#allocation6 + $0x248] sm:$0xff]
      %v369 = vld [vmem:[#allocation6 + $0x250] sm:$0xff]
      %v370 = vld [vmem:[#allocation6 + $0x258] sm:$0xff]
      %v371 = vld [vmem:[#allocation6 + $0x260] sm:$0xff]
      %v372 = vld [vmem:[#allocation6 + $0x268] sm:$0xff]
      %v373 = vld [vmem:[#allocation6 + $0x270] sm:$0xff]
      %v374 = vld [vmem:[#allocation6 + $0x278] sm:$0xff]
      %v375 = vld [vmem:[#allocation6 + $0x280] sm:$0xff]
      %v376 = vld [vmem:[#allocation6 + $0x288] sm:$0xff]
      %v377 = vld [vmem:[#allocation6 + $0x290] sm:$0xff]
      %v378 = vld [vmem:[#allocation6 + $0x298] sm:$0xff]
      %v379 = vld [vmem:[#allocation6 + $0x2a0] sm:$0xff]
      %v380 = vld [vmem:[#allocation6 + $0x2a8] sm:$0xff]
      %v381 = vld [vmem:[#allocation6 + $0x2b0] sm:$0xff]
      %v382 = vld [vmem:[#allocation6 + $0x2b8] sm:$0xff]
      %v383 = vld [vmem:[#allocation6 + $0x2c0] sm:$0xff]
      %v384 = vld [vmem:[#allocation6 + $0x2c8] sm:$0xff]
      %v385 = vld [vmem:[#allocation6 + $0x2d0] sm:$0xff]
      %v386 = vld [vmem:[#allocation6 + $0x2d8] sm:$0xff]
      %v387 = vld [vmem:[#allocation6 + $0x2e0] sm:$0xff]
      %v388 = vld [vmem:[#allocation6 + $0x2e8] sm:$0xff]
      %v389 = vld [vmem:[#allocation6 + $0x2f0] sm:$0xff]
      %v390 = vld [vmem:[#allocation6 + $0x2f8] sm:$0xff]
      %v393 = vcombine.high %v293, %v293
      %v395 = vunpack.c.l.s4 1983009808
      %v396 = vunpack.c.0.s8 %v395
      %v397 = vlaneseq
      %v398 = vshrl.u32 %v397, 7
      %v399 = vsub.s32 %v396, %v398
      %v400 = vrot.slane %v293, %v399
      %v402 = vunpack.c.l.s4 1983009808
      %v403 = vunpack.c.0.s8 %v402
      %v404 = vlaneseq
      %v405 = vshrl.u32 %v404, 7
      %v406 = vsub.s32 %v403, %v405
      %v407 = vrot.slane %v393, %v406
      %v408 = vcombine.high %v400, %v400
      %v409 = vcombine.high %v407, %v407
      %v411 = vunpack.c.l.s4 1983009808
      %v412 = vunpack.c.0.s8 %v411
      %v413 = vlaneseq
      %v414 = vshrl.u32 %v413, 7
      %v415 = vsub.s32 %v412, %v414
      %v416 = vrot.slane %v294, %v415
      %v417 = vcombine.high %v416, %v416
      %424 = vmatprep.subr.mxu0 0.0
      %425 = vmatpush1.msra.mxu0 %v295
      %426 = vmatprep.subr.mxu0 0.0
      %427 = vmatpush1.msra.mxu0 %v296
      %428 = vmatprep.subr.mxu0 0.0
      %429 = vmatpush1.msra.mxu0 %v297
      %430 = vmatprep.subr.mxu0 0.0
      %431 = vmatpush1.msra.mxu0 %v298
      %432 = vmatprep.subr.mxu0 0.0
      %433 = vmatpush1.msra.mxu0 %v299
      %434 = vmatprep.subr.mxu0 0.0
      %435 = vmatpush1.msra.mxu0 %v300
      %436 = vmatprep.subr.mxu0 0.0
      %437 = vmatpush1.msra.mxu0 %v301
      %438 = vmatprep.subr.mxu0 0.0
      %439 = vmatpush1.msra.mxu0 %v302
      %440 = vmatprep.subr.mxu0 0.0
      %441 = vmatpush1.msra.mxu0 %v303
      %442 = vmatprep.subr.mxu0 0.0
      %443 = vmatpush1.msra.mxu0 %v304
      %444 = vmatprep.subr.mxu0 0.0
      %445 = vmatpush1.msra.mxu0 %v305
      %446 = vmatprep.subr.mxu0 0.0
      %447 = vmatpush1.msra.mxu0 %v306
      %448 = vmatprep.subr.mxu0 0.0
      %449 = vmatpush1.msra.mxu0 %v307
      %450 = vmatprep.subr.mxu0 0.0
      %451 = vmatpush1.msra.mxu0 %v308
      %452 = vmatprep.subr.mxu0 0.0
      %453 = vmatpush1.msra.mxu0 %v309
      %454 = vmatprep.subr.mxu0 0.0
      %455 = vmatpush1.msra.mxu0 %v310
      %456 = vmatprep.subr.mxu0 0.0
      %457 = vmatpush1.msra.mxu0 %v311
      %458 = vmatprep.subr.mxu0 0.0
      %459 = vmatpush1.msra.mxu0 %v312
      %460 = vmatprep.subr.mxu0 0.0
      %461 = vmatpush1.msra.mxu0 %v313
      %462 = vmatprep.subr.mxu0 0.0
      %463 = vmatpush1.msra.mxu0 %v314
      %464 = vmatprep.subr.mxu0 0.0
      %465 = vmatpush1.msra.mxu0 %v315
      %466 = vmatprep.subr.mxu0 0.0
      %467 = vmatpush1.msra.mxu0 %v316
      %468 = vmatprep.subr.mxu0 0.0
      %469 = vmatpush1.msra.mxu0 %v317
      %470 = vmatprep.subr.mxu0 0.0
      %471 = vmatpush1.msra.mxu0 %v318
      %472 = vmatprep.subr.mxu0 0.0
      %473 = vmatpush1.msra.mxu0 %v319
      %474 = vmatprep.subr.mxu0 0.0
      %475 = vmatpush1.msra.mxu0 %v320
      %476 = vmatprep.subr.mxu0 0.0
      %477 = vmatpush1.msra.mxu0 %v321
      %478 = vmatprep.subr.mxu0 0.0
      %479 = vmatpush1.msra.mxu0 %v322
      %480 = vmatprep.subr.mxu0 0.0
      %481 = vmatpush1.msra.mxu0 %v323
      %482 = vmatprep.subr.mxu0 0.0
      %483 = vmatpush1.msra.mxu0 %v324
      %484 = vmatprep.subr.mxu0 0.0
      %485 = vmatpush1.msra.mxu0 %v325
      %486 = vmatprep.subr.mxu0 0.0
      %487 = vmatpush1.msra.mxu0 %v326
      %488 = vmatprep.mubr.f32.mxu0 %v408
      %489 = vmatmul.mubr.f32.gmra.mrb[0].mxu0 %v400
      %v490 = vpop.f32.mrb[0].mxu0
      %v491 = vadd.f32 0.0, %v490
      %v492 = vpop.f32.mrb[0].mxu0
      %493 = vdwg.mxu0
      %494 = vmatprep.subr.mxu0 0.0
      %495 = vmatpush1.msra.mxu0 %v327
      %496 = vmatprep.subr.mxu0 0.0
      %497 = vmatpush1.msra.mxu0 %v328
      %498 = vmatprep.subr.mxu0 0.0
      %499 = vmatpush1.msra.mxu0 %v329
      %500 = vmatprep.subr.mxu0 0.0
      %501 = vmatpush1.msra.mxu0 %v330
      %502 = vmatprep.subr.mxu0 0.0
      %503 = vmatpush1.msra.mxu0 %v331
      %504 = vmatprep.subr.mxu0 0.0
      %505 = vmatpush1.msra.mxu0 %v332
      %506 = vmatprep.subr.mxu0 0.0
      %507 = vmatpush1.msra.mxu0 %v333
      %508 = vmatprep.subr.mxu0 0.0
      %509 = vmatpush1.msra.mxu0 %v334
      %510 = vmatprep.subr.mxu0 0.0
      %511 = vmatpush1.msra.mxu0 %v335
      %512 = vmatprep.subr.mxu0 0.0
      %513 = vmatpush1.msra.mxu0 %v336
      %514 = vmatprep.subr.mxu0 0.0
      %515 = vmatpush1.msra.mxu0 %v337
      %516 = vmatprep.subr.mxu0 0.0
      %517 = vmatpush1.msra.mxu0 %v338
      %518 = vmatprep.subr.mxu0 0.0
      %519 = vmatpush1.msra.mxu0 %v339
      %520 = vmatprep.subr.mxu0 0.0
      %521 = vmatpush1.msra.mxu0 %v340
      %522 = vmatprep.subr.mxu0 0.0
      %523 = vmatpush1.msra.mxu0 %v341
      %524 = vmatprep.subr.mxu0 0.0
      %525 = vmatpush1.msra.mxu0 %v342
      %526 = vmatprep.subr.mxu0 0.0
      %527 = vmatpush1.msra.mxu0 %v343
      %528 = vmatprep.subr.mxu0 0.0
      %529 = vmatpush1.msra.mxu0 %v344
      %530 = vmatprep.subr.mxu0 0.0
      %531 = vmatpush1.msra.mxu0 %v345
      %532 = vmatprep.subr.mxu0 0.0
      %533 = vmatpush1.msra.mxu0 %v346
      %534 = vmatprep.subr.mxu0 0.0
      %535 = vmatpush1.msra.mxu0 %v347
      %536 = vmatprep.subr.mxu0 0.0
      %537 = vmatpush1.msra.mxu0 %v348
      %538 = vmatprep.subr.mxu0 0.0
      %539 = vmatpush1.msra.mxu0 %v349
      %540 = vmatprep.subr.mxu0 0.0
      %541 = vmatpush1.msra.mxu0 %v350
      %542 = vmatprep.subr.mxu0 0.0
      %543 = vmatpush1.msra.mxu0 %v351
      %544 = vmatprep.subr.mxu0 0.0
      %545 = vmatpush1.msra.mxu0 %v352
      %546 = vmatprep.subr.mxu0 0.0
      %547 = vmatpush1.msra.mxu0 %v353
      %548 = vmatprep.subr.mxu0 0.0
      %549 = vmatpush1.msra.mxu0 %v354
      %550 = vmatprep.subr.mxu0 0.0
      %551 = vmatpush1.msra.mxu0 %v355
      %552 = vmatprep.subr.mxu0 0.0
      %553 = vmatpush1.msra.mxu0 %v356
      %554 = vmatprep.subr.mxu0 0.0
      %555 = vmatpush1.msra.mxu0 %v357
      %556 = vmatprep.subr.mxu0 0.0
      %557 = vmatpush1.msra.mxu0 %v358
      %558 = vmatprep.mubr.f32.mxu0 %v409
      %559 = vmatmul.mubr.f32.gmra.mrb[0].mxu0 %v407
      %v560 = vpop.f32.mrb[0].mxu0
      %v561 = vadd.f32 %v491, %v560
      %v562 = vpop.f32.mrb[0].mxu0
      %563 = vdwg.mxu0
      %564 = vmatprep.subr.mxu0 0.0
      %565 = vmatpush1.msra.mxu0 %v359
      %566 = vmatprep.subr.mxu0 0.0
      %567 = vmatpush1.msra.mxu0 %v360
      %568 = vmatprep.subr.mxu0 0.0
      %569 = vmatpush1.msra.mxu0 %v361
      %570 = vmatprep.subr.mxu0 0.0
      %571 = vmatpush1.msra.mxu0 %v362
      %572 = vmatprep.subr.mxu0 0.0
      %573 = vmatpush1.msra.mxu0 %v363
      %574 = vmatprep.subr.mxu0 0.0
      %575 = vmatpush1.msra.mxu0 %v364
      %576 = vmatprep.subr.mxu0 0.0
      %577 = vmatpush1.msra.mxu0 %v365
      %578 = vmatprep.subr.mxu0 0.0
      %579 = vmatpush1.msra.mxu0 %v366
      %580 = vmatprep.subr.mxu0 0.0
      %581 = vmatpush1.msra.mxu0 %v367
      %582 = vmatprep.subr.mxu0 0.0
      %583 = vmatpush1.msra.mxu0 %v368
      %584 = vmatprep.subr.mxu0 0.0
      %585 = vmatpush1.msra.mxu0 %v369
      %586 = vmatprep.subr.mxu0 0.0
      %587 = vmatpush1.msra.mxu0 %v370
      %588 = vmatprep.subr.mxu0 0.0
      %589 = vmatpush1.msra.mxu0 %v371
      %590 = vmatprep.subr.mxu0 0.0
      %591 = vmatpush1.msra.mxu0 %v372
      %592 = vmatprep.subr.mxu0 0.0
      %593 = vmatpush1.msra.mxu0 %v373
      %594 = vmatprep.subr.mxu0 0.0
      %595 = vmatpush1.msra.mxu0 %v374
      %596 = vmatprep.subr.mxu0 0.0
      %597 = vmatpush1.msra.mxu0 %v375
      %598 = vmatprep.subr.mxu0 0.0
      %599 = vmatpush1.msra.mxu0 %v376
      %600 = vmatprep.subr.mxu0 0.0
      %601 = vmatpush1.msra.mxu0 %v377
      %602 = vmatprep.subr.mxu0 0.0
      %603 = vmatpush1.msra.mxu0 %v378
      %604 = vmatprep.subr.mxu0 0.0
      %605 = vmatpush1.msra.mxu0 %v379
      %606 = vmatprep.subr.mxu0 0.0
      %607 = vmatpush1.msra.mxu0 %v380
      %608 = vmatprep.subr.mxu0 0.0
      %609 = vmatpush1.msra.mxu0 %v381
      %610 = vmatprep.subr.mxu0 0.0
      %611 = vmatpush1.msra.mxu0 %v382
      %612 = vmatprep.subr.mxu0 0.0
      %613 = vmatpush1.msra.mxu0 %v383
      %614 = vmatprep.subr.mxu0 0.0
      %615 = vmatpush1.msra.mxu0 %v384
      %616 = vmatprep.subr.mxu0 0.0
      %617 = vmatpush1.msra.mxu0 %v385
      %618 = vmatprep.subr.mxu0 0.0
      %619 = vmatpush1.msra.mxu0 %v386
      %620 = vmatprep.subr.mxu0 0.0
      %621 = vmatpush1.msra.mxu0 %v387
      %622 = vmatprep.subr.mxu0 0.0
      %623 = vmatpush1.msra.mxu0 %v388
      %624 = vmatprep.subr.mxu0 0.0
      %625 = vmatpush1.msra.mxu0 %v389
      %626 = vmatprep.subr.mxu0 0.0
      %627 = vmatpush1.msra.mxu0 %v390
      %628 = vmatprep.mubr.f32.mxu0 %v417
      %629 = vmatmul.mubr.f32.gmra.mrb[0].mxu0 %v416
      %v630 = vpop.f32.mrb[0].mxu0
      %v631 = vadd.f32 %v561, %v630
      %v632 = vpop.f32.mrb[0].mxu0
      %633 = vdwg.mxu0
      %v634 = vld [vmem:[%s0] sm:$0x3]
      %v635 = vcvt.s32.f32 %v634
      %v636 = vmax.f32 %v635, 1e-09
      %638 = vset.pattern.permute.xlu0 0
      %639 = vperm.xlu0 %638, %v636
      %v640 = vpop.permute.xlu0 %639
      %v642 = vrcp.pop %v640
      %v643 = vmul.f32 %v631, %v642
      %v644 = vld [vmem:[%s3] sm:$0x1]
      %v646 = vlaneseq
      %v647 = vshrl.u32 %v646, 7
      %v648 = vsub.s32 0, %v647
      %v649 = vrot.slane %v644, %v648
      %v651 = vadd.f32 %v643, %v649
      %v652 = vmul.f32 %v651, %v651
      %vm653 = vcmask 1041408
      %v654 = vsel %vm653, %v652, 0.0
      %655 = vadd.xlane.f32.xlu0 %v654
      %v656 = vpop.xlane.xlu0 %655
      %v657 = vmax.f32 %v656, 1e-24
      %v658 = vrsqrt.pop %v657
      %v659 = vmul.f32 %v651, %v658
      %660 = vst [vmem:[#allocation8] sm:$0x3] %v659
    $region33: #{tpu_custom_call.1} parent=1 // pred_fallthru
      _
    // Predicated region
    $region34: #{tpu_custom_call.1} parent=1 // pred_check
      _
    $region35: #{tpu_custom_call.1} parent=1 // pred_check_branch
      %662 = sbr.rel (0) target = $region37
    $region36: #{tpu_custom_call.1} parent=1 // pred_region
      %s664 = ssub.s32 32, 32
      %665 = vsyncadd [#allocation5], %s664
      %s667 = sshll.u32 [#allocation8], 4
      %s668 = int_to_ptr.vmem [resolvable:$true] %s667
      %670 = dma.vmem_to_hbm [thread:$0]  %s668, 32, %s4, [#allocation5]
    $region37: #{tpu_custom_call.1} parent=1 // pred_fallthru
      _
    // Predicated region
    $region38: #{tpu_custom_call.1} parent=1 // pred_check
      _
    $region39: #{tpu_custom_call.1} parent=1 // pred_check_branch
      %672 = sbr.rel (0) target = $region41
    $region40: #{tpu_custom_call.1} parent=1 // pred_region
      %673 = dma.done [#allocation5], 32
    $region41: #{tpu_custom_call.1} parent=1 // pred_fallthru
      _
    %674 = vsyncpa [#allocation4], 1
    %675 = vsyncpa [#allocation7], 1
    %676 = vsyncpa [#allocation5], 1

</llo_original>
